<compile_context>
chip_gen: v6e
topology: v6e:2x2x1
jax: 0.10.0
libtpu: 0.0.40
codegen_flags: <defaults>
</compile_context>

<pallas_src>
import math

import jax
import jax.numpy as jnp
from jax.experimental import pallas as pl
from jax.experimental.pallas import tpu as pltpu

BN_EPS = 1e-3
LANE = 128


def _round_up(n, m):
    return (n + m - 1) // m * m


# ---------------------------------------------------------------------------
# Kernel: whole Encoder forward for one batch tile.
# ---------------------------------------------------------------------------
def encoder_kernel(x_ref, w_ref, bias_ref, wh_ref, bh_ref, noise_ref,
                   qm_ref, qv_ref, lat_ref):
    h = x_ref[...]
    # FC stack: (Dropout = identity in eval) -> Linear(+folded BN, +covariate
    # row-bias) -> ReLU.  Static unroll over layers; weights are VMEM resident.
    for l in range(w_ref.shape[0]):
        z = jnp.dot(h, w_ref[l], preferred_element_type=jnp.float32)
        h = jnp.maximum(z + bias_ref[l], 0.0)
    # mean / var heads packed side by side -> one MXU matmul.
    zh = jnp.dot(h, wh_ref[...], preferred_element_type=jnp.float32) + bh_ref[...]
    pl_lat = qm_ref.shape[1]
    q_m = zh[:, :pl_lat]
    q_v = jnp.exp(zh[:, pl_lat:])
    qm_ref[...] = q_m
    qv_ref[...] = q_v
    # reparameterize: Normal(q_m, sqrt(q_v)).rsample() = q_m + sqrt(q_v) * eps
    lat_ref[...] = q_m + jnp.sqrt(q_v) * noise_ref[...]


def encoder_pallas(x_pad, w_stack, bias_stack, w_head, b_head, noise, *, tb):
    Bp, P = x_pad.shape
    L = w_stack.shape[0]
    PL2 = w_head.shape[1]
    PL = PL2 // 2
    out_sds = jax.ShapeDtypeStruct((Bp, PL), jnp.float32)
    return pl.pallas_call(
        encoder_kernel,
        out_shape=(out_sds, out_sds, out_sds),
        grid=(Bp // tb,),
        in_specs=[
            pl.BlockSpec((tb, P), lambda i: (i, 0)),          # x tile
            pl.BlockSpec((L, P, P), lambda i: (0, 0, 0)),     # folded layer weights (resident)
            pl.BlockSpec((L, tb, P), lambda i: (0, i, 0)),    # per-row bias (incl. covariate)
            pl.BlockSpec((P, PL2), lambda i: (0, 0)),         # packed mean|var head weights
            pl.BlockSpec((1, PL2), lambda i: (0, 0)),         # packed head bias
            pl.BlockSpec((tb, PL), lambda i: (i, 0)),         # N(0,1) noise for rsample
        ],
        out_specs=(
            pl.BlockSpec((tb, PL), lambda i: (i, 0)),
            pl.BlockSpec((tb, PL), lambda i: (i, 0)),
            pl.BlockSpec((tb, PL), lambda i: (i, 0)),
        ),
        compiler_params=pltpu.CompilerParams(
            dimension_semantics=("parallel",)),
    )(x_pad, w_stack, bias_stack, w_head, b_head, noise)


# ---------------------------------------------------------------------------
# Parameter init mirroring nn.Linear / nn.BatchNorm1d defaults.
# ---------------------------------------------------------------------------
def init_encoder_params(key, n_input, n_hidden, n_latent, n_cat, n_layers):
    layers_dim = [n_input] + (n_layers - 1) * [n_hidden] + [n_hidden]
    enc = []
    for d_in, d_out in zip(layers_dim[:-1], layers_dim[1:]):
        fan_in = d_in + n_cat
        key, kw, kb = jax.random.split(key, 3)
        bound = 1.0 / math.sqrt(fan_in)
        w = jax.random.uniform(kw, (fan_in, d_out), jnp.float32, -bound, bound)
        b = jax.random.uniform(kb, (d_out,), jnp.float32, -bound, bound)
        enc.append(dict(
            w=w, b=b,
            gamma=jnp.ones((d_out,), jnp.float32),
            beta=jnp.zeros((d_out,), jnp.float32),
            rmean=jnp.zeros((d_out,), jnp.float32),
            rvar=jnp.ones((d_out,), jnp.float32),
            d_in=d_in, d_out=d_out))
    heads = []
    for _ in range(2):  # mean_encoder, var_encoder
        key, kw, kb = jax.random.split(key, 3)
        bound = 1.0 / math.sqrt(n_hidden)
        w = jax.random.uniform(kw, (n_hidden, n_latent), jnp.float32, -bound, bound)
        b = jax.random.uniform(kb, (n_latent,), jnp.float32, -bound, bound)
        heads.append((w, b))
    return enc, heads


# ---------------------------------------------------------------------------
# Prep: fold BN, turn one-hot covariate into a per-row bias, pad to 128 lanes.
# ---------------------------------------------------------------------------
def prepare_fused(enc, heads, o_idx, n_cat, batch):
    P = _round_up(max(max(p["d_in"] for p in enc),
                      max(p["d_out"] for p in enc)), LANE)
    n_latent = heads[0][0].shape[1]
    PL = _round_up(n_latent, LANE)
    L = len(enc)

    w_stack = jnp.zeros((L, P, P), jnp.float32)
    bias_stack = jnp.zeros((L, batch, P), jnp.float32)
    for l, p in enumerate(enc):
        scale = p["gamma"] * jax.lax.rsqrt(p["rvar"] + BN_EPS)      # (d_out,)
        w_f = p["w"] * scale[None, :]                               # fold BN into W (f32)
        b_f = (p["b"] - p["rmean"]) * scale + p["beta"]             # fold BN into b
        w_x = w_f[:p["d_in"]]                                       # dense activation rows
        bias_rows = jnp.broadcast_to(b_f[None, :], (batch, p["d_out"]))
        if n_cat:
            w_cov = w_f[p["d_in"]:]                                 # (n_cat, d_out)
            # one_hot(o) @ w_cov  ==  row gather of the covariate weight slice
            bias_rows = bias_rows + jnp.take(w_cov, o_idx[:, 0], axis=0)
        w_stack = w_stack.at[l, :p["d_in"], :p["d_out"]].set(w_x)
        bias_stack = bias_stack.at[l, :, :p["d_out"]].set(bias_rows)

    (wm, bm), (wv, bv) = heads
    n_hidden = wm.shape[0]
    w_head = jnp.zeros((P, 2 * PL), jnp.float32)
    w_head = w_head.at[:n_hidden, :n_latent].set(wm)
    w_head = w_head.at[:n_hidden, PL:PL + n_latent].set(wv)
    b_head = jnp.zeros((1, 2 * PL), jnp.float32)
    b_head = b_head.at[0, :n_latent].set(bm)
    b_head = b_head.at[0, PL:PL + n_latent].set(bv)
    return w_stack, bias_stack, w_head, b_head, P, PL


def encoder_forward(enc, heads, x, o_idx, n_cat, eps):
    """eps: (B, n_latent) standard-normal noise for the reparameterization."""
    B, n_input = x.shape
    n_latent = heads[0][0].shape[1]
    L = len(enc)

    tb = min(_round_up(B, 8), 256)      # batch tile (sublane aligned)
    Bp = _round_up(B, tb)

    w_stack, bias_raw, w_head, b_head, P, PL = prepare_fused(enc, heads, o_idx, n_cat, B)
    x_pad = jnp.zeros((Bp, P), jnp.float32).at[:B, :n_input].set(x)
    bias_stack = jnp.zeros((L, Bp, P), jnp.float32).at[:, :B, :].set(bias_raw)
    eps_pad = jnp.zeros((Bp, PL), jnp.float32).at[:B, :n_latent].set(eps)

    q_m, q_v, latent = encoder_pallas(x_pad, w_stack, bias_stack,
                                      w_head, b_head, eps_pad, tb=tb)
    return q_m[:B, :n_latent], q_v[:B, :n_latent], latent[:B, :n_latent]


# ---------------------------------------------------------------------------
# Pure-JAX reference (unfused, unfolded) for correctness checking.
# ---------------------------------------------------------------------------
def encoder_ref(enc, heads, x, o_idx, n_cat, eps):
    hi = jax.lax.Precision.HIGHEST
    oh = jax.nn.one_hot(o_idx[:, 0], n_cat, dtype=jnp.float32) if n_cat else None
    h = x
    for p in enc:
        inp = jnp.concatenate([h, oh], axis=1) if n_cat else h
        z = jnp.dot(inp, p["w"], precision=hi) + p["b"]
        z = (z - p["rmean"]) * jax.lax.rsqrt(p["rvar"] + BN_EPS) * p["gamma"] + p["beta"]
        h = jnp.maximum(z, 0.0)
    (wm, bm), (wv, bv) = heads
    q_m = jnp.dot(h, wm, precision=hi) + bm
    q_v = jnp.exp(jnp.dot(h, wv, precision=hi) + bv)
    return q_m, q_v, q_m + jnp.sqrt(q_v) * eps


if __name__ == "__main__":
    # Encoder(n_input=24, n_hidden=32, n_latent=10, n_cat=3, n_layers=2)
    n_input, n_hidden, n_latent = 24, 32, 10
    n_cat, n_layers = 3, 2
    batch = 8

    key = jax.random.PRNGKey(0)
    key, kx, ko, kp, kn = jax.random.split(key, 5)

    x = jax.random.normal(kx, (batch, n_input), jnp.float32)
    o = jax.random.randint(ko, (batch, 1), 0, n_cat, jnp.int32)
    eps = jax.random.normal(kn, (batch, n_latent), jnp.float32)

    enc, heads = init_encoder_params(kp, n_input, n_hidden, n_latent, n_cat, n_layers)

    q_m, q_v, latent = encoder_forward(enc, heads, x, o, n_cat, eps)
    q_m, q_v, latent = jax.block_until_ready((q_m, q_v, latent))

    # shape / sanity checks
    assert q_m.shape == (batch, n_latent) and q_v.shape == (batch, n_latent)
    assert latent.shape == (batch, n_latent)
    for t in (q_m, q_v, latent):
        assert t.dtype == jnp.float32
        assert bool(jnp.all(jnp.isfinite(t)))
    assert bool(jnp.all(q_v > 0.0))

    # numeric check against unfused/unfolded reference
    rm, rv, rl = encoder_ref(enc, heads, x, o, n_cat, eps)
    assert bool(jnp.allclose(q_m, rm, atol=2e-4, rtol=2e-4))
    assert bool(jnp.allclose(q_v, rv, atol=2e-4, rtol=2e-4))
    assert bool(jnp.allclose(latent, rl, atol=2e-4, rtol=2e-4))

    print("KERNEL_OK")
</pallas_src>

<mosaic_0001>
module attributes {stable_mosaic.version = 11 : i64} {
  func.func @encoder_kernel(%arg0: i32, %arg1: memref<8x128xf32, #tpu.memory_space<vmem>>, %arg2: memref<2x128x128xf32, #tpu.memory_space<vmem>>, %arg3: memref<2x8x128xf32, #tpu.memory_space<vmem>>, %arg4: memref<128x256xf32, #tpu.memory_space<vmem>>, %arg5: memref<1x256xf32, #tpu.memory_space<vmem>>, %arg6: memref<8x128xf32, #tpu.memory_space<vmem>>, %arg7: memref<8x128xf32, #tpu.memory_space<vmem>>, %arg8: memref<8x128xf32, #tpu.memory_space<vmem>>, %arg9: memref<8x128xf32, #tpu.memory_space<vmem>>) attributes {dimension_semantics = [#tpu.dimension_semantics<parallel>], iteration_bounds = array<i64: 1>, scalar_prefetch = 0 : i64, scratch_operands = 0 : i64, tpu.core_type = #tpu.core_type<tc>, window_params = [{transform_indices = @transform_0, window_bounds = array<i64: 8, 128>}, {pipeline_mode = #tpu.pipeline_mode<synchronous>, transform_indices = @transform_1, window_bounds = array<i64: 2, 128, 128>}, {transform_indices = @transform_2, window_bounds = array<i64: 2, 8, 128>}, {pipeline_mode = #tpu.pipeline_mode<synchronous>, transform_indices = @transform_3, window_bounds = array<i64: 128, 256>}, {pipeline_mode = #tpu.pipeline_mode<synchronous>, transform_indices = @transform_4, window_bounds = array<i64: 1, 256>}, {transform_indices = @transform_5, window_bounds = array<i64: 8, 128>}, {transform_indices = @transform_6, window_bounds = array<i64: 8, 128>}, {transform_indices = @transform_7, window_bounds = array<i64: 8, 128>}, {transform_indices = @transform_8, window_bounds = array<i64: 8, 128>}]} {
    %c0 = arith.constant 0 : index
    %c0_0 = arith.constant 0 : index
    %0 = vector.load %arg1[%c0, %c0_0] : memref<8x128xf32, #tpu.memory_space<vmem>>, vector<8x128xf32>
    %c0_1 = arith.constant 0 : index
    %c0_2 = arith.constant 0 : index
    %c0_3 = arith.constant 0 : index
    %1 = vector.load %arg2[%c0_1, %c0_2, %c0_3] : memref<2x128x128xf32, #tpu.memory_space<vmem>>, vector<1x128x128xf32>
    %2 = vector.shape_cast %1 : vector<1x128x128xf32> to vector<128x128xf32>
    %cst = arith.constant dense<0.000000e+00> : vector<8x128xf32>
    %3 = tpu.matmul %0, %2, %cst {dimension_numbers = #tpu.dot_dimension_numbers<[1], [0], [0], [1], [0, 0, 1, 1], [], []>} : vector<8x128xf32>, vector<128x128xf32>, vector<8x128xf32> -> vector<8x128xf32>
    %c0_4 = arith.constant 0 : index
    %c0_5 = arith.constant 0 : index
    %c0_6 = arith.constant 0 : index
    %4 = vector.load %arg3[%c0_4, %c0_5, %c0_6] : memref<2x8x128xf32, #tpu.memory_space<vmem>>, vector<1x8x128xf32>
    %5 = vector.shape_cast %4 : vector<1x8x128xf32> to vector<8x128xf32>
    %6 = arith.addf %3, %5 : vector<8x128xf32>
    %cst_7 = arith.constant 0.000000e+00 : f32
    %7 = vector.broadcast %cst_7 : f32 to vector<8x128xf32>
    %8 = arith.maximumf %6, %7 : vector<8x128xf32>
    %c1 = arith.constant 1 : index
    %c0_8 = arith.constant 0 : index
    %c0_9 = arith.constant 0 : index
    %9 = vector.load %arg2[%c1, %c0_8, %c0_9] : memref<2x128x128xf32, #tpu.memory_space<vmem>>, vector<1x128x128xf32>
    %10 = vector.shape_cast %9 : vector<1x128x128xf32> to vector<128x128xf32>
    %cst_10 = arith.constant dense<0.000000e+00> : vector<8x128xf32>
    %11 = tpu.matmul %8, %10, %cst_10 {dimension_numbers = #tpu.dot_dimension_numbers<[1], [0], [0], [1], [0, 0, 1, 1], [], []>} : vector<8x128xf32>, vector<128x128xf32>, vector<8x128xf32> -> vector<8x128xf32>
    %c1_11 = arith.constant 1 : index
    %c0_12 = arith.constant 0 : index
    %c0_13 = arith.constant 0 : index
    %12 = vector.load %arg3[%c1_11, %c0_12, %c0_13] : memref<2x8x128xf32, #tpu.memory_space<vmem>>, vector<1x8x128xf32>
    %13 = vector.shape_cast %12 : vector<1x8x128xf32> to vector<8x128xf32>
    %14 = arith.addf %11, %13 : vector<8x128xf32>
    %cst_14 = arith.constant 0.000000e+00 : f32
    %15 = vector.broadcast %cst_14 : f32 to vector<8x128xf32>
    %16 = arith.maximumf %14, %15 : vector<8x128xf32>
    %c0_15 = arith.constant 0 : index
    %c0_16 = arith.constant 0 : index
    %17 = vector.load %arg4[%c0_15, %c0_16] : memref<128x256xf32, #tpu.memory_space<vmem>>, vector<128x256xf32>
    %cst_17 = arith.constant dense<0.000000e+00> : vector<8x256xf32>
    %18 = tpu.matmul %16, %17, %cst_17 {dimension_numbers = #tpu.dot_dimension_numbers<[1], [0], [0], [1], [0, 0, 1, 1], [], []>} : vector<8x128xf32>, vector<128x256xf32>, vector<8x256xf32> -> vector<8x256xf32>
    %c0_18 = arith.constant 0 : index
    %c0_19 = arith.constant 0 : index
    %19 = vector.load %arg5[%c0_18, %c0_19] : memref<1x256xf32, #tpu.memory_space<vmem>>, vector<1x256xf32>
    %20 = vector.broadcast %19 : vector<1x256xf32> to vector<8x256xf32>
    %21 = arith.addf %18, %20 : vector<8x256xf32>
    %22 = vector.extract_strided_slice %21 {offsets = [0, 0], sizes = [8, 128], strides = [1, 1]} : vector<8x256xf32> to vector<8x128xf32>
    %23 = vector.extract_strided_slice %21 {offsets = [0, 128], sizes = [8, 128], strides = [1, 1]} : vector<8x256xf32> to vector<8x128xf32>
    %24 = math.exp %23 : vector<8x128xf32>
    %c0_20 = arith.constant 0 : index
    %c0_21 = arith.constant 0 : index
    %25 = vector.load %arg7[%c0_20, %c0_21] : memref<8x128xf32, #tpu.memory_space<vmem>>, vector<8x128xf32>
    tpu.vector_store %arg7[%c0_20, %c0_21], %22 {strides = array<i32>} : memref<8x128xf32, #tpu.memory_space<vmem>>, vector<8x128xf32>,
    %c0_22 = arith.constant 0 : index
    %c0_23 = arith.constant 0 : index
    %26 = vector.load %arg8[%c0_22, %c0_23] : memref<8x128xf32, #tpu.memory_space<vmem>>, vector<8x128xf32>
    tpu.vector_store %arg8[%c0_22, %c0_23], %24 {strides = array<i32>} : memref<8x128xf32, #tpu.memory_space<vmem>>, vector<8x128xf32>,
    %27 = math.sqrt %24 : vector<8x128xf32>
    %c0_24 = arith.constant 0 : index
    %c0_25 = arith.constant 0 : index
    %28 = vector.load %arg6[%c0_24, %c0_25] : memref<8x128xf32, #tpu.memory_space<vmem>>, vector<8x128xf32>
    %29 = arith.mulf %27, %28 : vector<8x128xf32>
    %30 = arith.addf %22, %29 : vector<8x128xf32>
    %c0_26 = arith.constant 0 : index
    %c0_27 = arith.constant 0 : index
    %31 = vector.load %arg9[%c0_26, %c0_27] : memref<8x128xf32, #tpu.memory_space<vmem>>, vector<8x128xf32>
    tpu.vector_store %arg9[%c0_26, %c0_27], %30 {strides = array<i32>} : memref<8x128xf32, #tpu.memory_space<vmem>>, vector<8x128xf32>,
    return
  }
  func.func @transform_0(%arg0: i32) -> (i32, i32) {
    %c0_i32 = arith.constant 0 : i32
    %c0_i32_0 = arith.constant 0 : i32
    return %arg0, %c0_i32 : i32, i32
  }
  func.func @transform_1(%arg0: i32) -> (i32, i32, i32) {
    %c0_i32 = arith.constant 0 : i32
    %c0_i32_0 = arith.constant 0 : i32
    %c0_i32_1 = arith.constant 0 : i32
    %c0_i32_2 = arith.constant 0 : i32
    return %c0_i32, %c0_i32_0, %c0_i32_1 : i32, i32, i32
  }
  func.func @transform_2(%arg0: i32) -> (i32, i32, i32) {
    %c0_i32 = arith.constant 0 : i32
    %c0_i32_0 = arith.constant 0 : i32
    %c0_i32_1 = arith.constant 0 : i32
    return %c0_i32, %arg0, %c0_i32_0 : i32, i32, i32
  }
  func.func @transform_3(%arg0: i32) -> (i32, i32) {
    %c0_i32 = arith.constant 0 : i32
    %c0_i32_0 = arith.constant 0 : i32
    %c0_i32_1 = arith.constant 0 : i32
    return %c0_i32, %c0_i32_0 : i32, i32
  }
  func.func @transform_4(%arg0: i32) -> (i32, i32) {
    %c0_i32 = arith.constant 0 : i32
    %c0_i32_0 = arith.constant 0 : i32
    %c0_i32_1 = arith.constant 0 : i32
    return %c0_i32, %c0_i32_0 : i32, i32
  }
  func.func @transform_5(%arg0: i32) -> (i32, i32) {
    %c0_i32 = arith.constant 0 : i32
    %c0_i32_0 = arith.constant 0 : i32
    return %arg0, %c0_i32 : i32, i32
  }
  func.func @transform_6(%arg0: i32) -> (i32, i32) {
    %c0_i32 = arith.constant 0 : i32
    %c0_i32_0 = arith.constant 0 : i32
    return %arg0, %c0_i32 : i32, i32
  }
  func.func @transform_7(%arg0: i32) -> (i32, i32) {
    %c0_i32 = arith.constant 0 : i32
    %c0_i32_0 = arith.constant 0 : i32
    return %arg0, %c0_i32 : i32, i32
  }
  func.func @transform_8(%arg0: i32) -> (i32, i32) {
    %c0_i32 = arith.constant 0 : i32
    %c0_i32_0 = arith.constant 0 : i32
    return %arg0, %c0_i32 : i32, i32
  }
}

</mosaic_0001>

<llo_original>
// kernel: tpu_custom_call.1
$region0: #{tpu_custom_call.1}
  #allocation0 [shape = 'u32[]', space=smem, size = 0x4, offset = 0x4, fixed_abs, tag = 'smem constant byte address 0x4 - core index']
  #allocation1 [shape = 'u32[144,128]{1,0:T(1,128)}', space=vmem, size = 0x12000, scoped, tag = 'internal scratch']
  %s0 = inlined_call_operand.hbm [shape: f32[8,128], index: 0, kind: input, shape index: {}]
  %s1 = inlined_call_operand.hbm [shape: f32[2,128,128], index: 1, kind: input, shape index: {}]
  %s2 = inlined_call_operand.hbm [shape: f32[2,8,128], index: 2, kind: input, shape index: {}]
  %s3 = inlined_call_operand.hbm [shape: f32[128,256], index: 3, kind: input, shape index: {}]
  %s4 = inlined_call_operand.hbm [shape: f32[1,256], index: 4, kind: input, shape index: {}]
  %s5 = inlined_call_operand.vmem [shape: f32[8,128], index: 5, kind: input, shape index: {}]
  %s6 = inlined_call_operand.hbm [shape: f32[8,128], index: 6, kind: output, shape index: {0}]
  %s7 = inlined_call_operand.hbm [shape: f32[8,128], index: 7, kind: output, shape index: {1}]
  %s8 = inlined_call_operand.hbm [shape: f32[8,128], index: 8, kind: output, shape index: {2}]
  %9 = xla_tuple %s6, %s7, %s8
  %s10 = sld [smem:[#allocation0]]
  $region70: #{tpu_custom_call.1} parent=0
    _
  %s12 = ssub.s32 1, %s10
  %s13 = scalar_select 0, %s12, %s10
  $region1: #{tpu_custom_call.1} parent=0
    #allocation2 [shape = 'u8[4096]{0}', space=vmem, size = 0x1000, scoped, tag = 'input window, operand 0, single buffered']
    #allocation3 [shape = 's32[1]{0}', space=sflag, size = 0x4, scoped, tag = 'scoped memory for tpu_custom_call.1']
    #allocation4 [shape = 's32[1]{0}', space=sflag, size = 0x4, scoped, tag = 'scoped memory for tpu_custom_call.1']
    #allocation5 [shape = 'u8[131072]{0}', space=vmem, size = 0x20000, scoped, tag = 'input window, operand 1, single buffered']
    #allocation6 [shape = 's32[1]{0}', space=sflag, size = 0x4, scoped, tag = 'scoped memory for tpu_custom_call.1']
    #allocation7 [shape = 'u8[8192]{0}', space=vmem, size = 0x2000, scoped, tag = 'input window, operand 2, single buffered']
    #allocation8 [shape = 'u8[131072]{0}', space=vmem, size = 0x20000, scoped, tag = 'input window, operand 3, single buffered']
    #allocation9 [shape = 's32[1]{0}', space=sflag, size = 0x4, scoped, tag = 'scoped memory for tpu_custom_call.1']
    #allocation10 [shape = 'u8[1024]{0}', space=vmem, size = 0x400, scoped, tag = 'input window, operand 4, single buffered']
    #allocation11 [shape = 'u8[4096]{0}', space=vmem, size = 0x1000, scoped, tag = 'output window, operand 0, single buffered']
    #allocation12 [shape = 'u8[4096]{0}', space=vmem, size = 0x1000, scoped, tag = 'output window, operand 1, single buffered']
    #allocation13 [shape = 's32[1]{0}', space=sflag, size = 0x4, scoped, tag = 'scoped memory for tpu_custom_call.1']
    #allocation14 [shape = 'u8[4096]{0}', space=vmem, size = 0x1000, scoped, tag = 'output window, operand 2, single buffered']
    %14 = vsyncpa [#allocation3], 0
    %15 = vsyncpa [#allocation6], 0
    %16 = vsyncpa [#allocation9], 0
    %17 = vsyncpa [#allocation4], 0
    %18 = vsyncpa [#allocation13], 0
    // Predicated region
    $region2: #{tpu_custom_call.1} parent=1 // pred_check
      _
    $region3: #{tpu_custom_call.1} parent=1 // pred_check_branch
      %20 = sbr.rel (0) target = $region5
    $region4: #{tpu_custom_call.1} parent=1 // pred_region
      %s22 = ssub.s32 128, 128
      %23 = vsyncadd [#allocation3], %s22
      %s25 = sshll.u32 [#allocation2], 4
      %s26 = int_to_ptr.vmem [resolvable:$true] %s25
      %28 = dma.hbm_to_vmem [thread:$0]  %s0, 128, %s26, [#allocation3]
    $region5: #{tpu_custom_call.1} parent=1 // pred_fallthru
      _
    // Predicated region
    $region6: #{tpu_custom_call.1} parent=1 // pred_check
      _
    $region7: #{tpu_custom_call.1} parent=1 // pred_check_branch
      %30 = sbr.rel (0) target = $region9
    $region8: #{tpu_custom_call.1} parent=1 // pred_region
      %s32 = ssub.s32 4096, 4096
      %33 = vsyncadd [#allocation6], %s32
      %s34 = sshll.u32 [#allocation5], 4
      %s35 = int_to_ptr.vmem [resolvable:$true] %s34
      %40 = dma.hbm_to_vmem [thread:$0]  %s1, 4096, %s35, [#allocation6], 128, 128, 8
    $region9: #{tpu_custom_call.1} parent=1 // pred_fallthru
      _
    // Predicated region
    $region10: #{tpu_custom_call.1} parent=1 // pred_check
      _
    $region11: #{tpu_custom_call.1} parent=1 // pred_check_branch
      %42 = sbr.rel (0) target = $region13
    $region12: #{tpu_custom_call.1} parent=1 // pred_region
      %s44 = ssub.s32 256, 256
      %45 = vsyncadd [#allocation6], %s44
      %s46 = sshll.u32 [#allocation7], 4
      %s47 = int_to_ptr.vmem [resolvable:$true] %s46
      %52 = dma.hbm_to_vmem [thread:$0]  %s2, 256, %s47, [#allocation6], 128, 128, 8
    $region13: #{tpu_custom_call.1} parent=1 // pred_fallthru
      _
    // Predicated region
    $region14: #{tpu_custom_call.1} parent=1 // pred_check
      _
    $region15: #{tpu_custom_call.1} parent=1 // pred_check_branch
      %54 = sbr.rel (0) target = $region17
    $region16: #{tpu_custom_call.1} parent=1 // pred_region
      %s56 = ssub.s32 4096, 4096
      %57 = vsyncadd [#allocation9], %s56
      %s58 = sshll.u32 [#allocation8], 4
      %s59 = int_to_ptr.vmem [resolvable:$true] %s58
      %64 = dma.hbm_to_vmem [thread:$0]  %s3, 4096, %s59, [#allocation9], 256, 256, 16
    $region17: #{tpu_custom_call.1} parent=1 // pred_fallthru
      _
    // Predicated region
    $region18: #{tpu_custom_call.1} parent=1 // pred_check
      _
    $region19: #{tpu_custom_call.1} parent=1 // pred_check_branch
      %66 = sbr.rel (0) target = $region21
    $region20: #{tpu_custom_call.1} parent=1 // pred_region
      %s68 = ssub.s32 32, 32
      %69 = vsyncadd [#allocation9], %s68
      %s71 = sshll.u32 [#allocation10], 4
      %s72 = int_to_ptr.vmem [resolvable:$true] %s71
      %74 = dma.hbm_to_vmem [thread:$0]  %s4, 32, %s72, [#allocation9]
    $region21: #{tpu_custom_call.1} parent=1 // pred_fallthru
      _
    // Predicated region
    $region22: #{tpu_custom_call.1} parent=1 // pred_check
      _
    $region23: #{tpu_custom_call.1} parent=1 // pred_check_branch
      %76 = sbr.rel (0) target = $region25
    $region24: #{tpu_custom_call.1} parent=1 // pred_region
      _
    $region25: #{tpu_custom_call.1} parent=1 // pred_fallthru
      _
    // Predicated region
    $region26: #{tpu_custom_call.1} parent=1 // pred_check
      _
    $region27: #{tpu_custom_call.1} parent=1 // pred_check_branch
      %78 = sbr.rel (0) target = $region29
    $region28: #{tpu_custom_call.1} parent=1 // pred_region
      %79 = dma.done [#allocation3], 128
    $region29: #{tpu_custom_call.1} parent=1 // pred_fallthru
      _
    // Predicated region
    $region30: #{tpu_custom_call.1} parent=1 // pred_check
      _
    $region31: #{tpu_custom_call.1} parent=1 // pred_check_branch
      %81 = sbr.rel (0) target = $region33
    $region32: #{tpu_custom_call.1} parent=1 // pred_region
      %82 = dma.done [#allocation6], 4096
    $region33: #{tpu_custom_call.1} parent=1 // pred_fallthru
      _
    // Predicated region
    $region34: #{tpu_custom_call.1} parent=1 // pred_check
      _
    $region35: #{tpu_custom_call.1} parent=1 // pred_check_branch
      %84 = sbr.rel (0) target = $region37
    $region36: #{tpu_custom_call.1} parent=1 // pred_region
      %85 = dma.done [#allocation6], 256
    $region37: #{tpu_custom_call.1} parent=1 // pred_fallthru
      _
    // Predicated region
    $region38: #{tpu_custom_call.1} parent=1 // pred_check
      _
    $region39: #{tpu_custom_call.1} parent=1 // pred_check_branch
      %87 = sbr.rel (0) target = $region41
    $region40: #{tpu_custom_call.1} parent=1 // pred_region
      %88 = dma.done [#allocation9], 4096
    $region41: #{tpu_custom_call.1} parent=1 // pred_fallthru
      _
    // Predicated region
    $region42: #{tpu_custom_call.1} parent=1 // pred_check
      _
    $region43: #{tpu_custom_call.1} parent=1 // pred_check_branch
      %90 = sbr.rel (0) target = $region45
    $region44: #{tpu_custom_call.1} parent=1 // pred_region
      %91 = dma.done [#allocation9], 32
    $region45: #{tpu_custom_call.1} parent=1 // pred_fallthru
      _
    %v92 = vld [vmem:[#allocation2] sm:$0xff]
    %v93 = vld [vmem:[#allocation5] sm:$0xff]
    %v94 = vld [vmem:[#allocation5 + $0x8] sm:$0xff]
    %v95 = vld [vmem:[#allocation5 + $0x10] sm:$0xff]
    %v96 = vld [vmem:[#allocation5 + $0x18] sm:$0xff]
    %v97 = vld [vmem:[#allocation5 + $0x20] sm:$0xff]
    %v98 = vld [vmem:[#allocation5 + $0x28] sm:$0xff]
    %v99 = vld [vmem:[#allocation5 + $0x30] sm:$0xff]
    %v100 = vld [vmem:[#allocation5 + $0x38] sm:$0xff]
    %v101 = vld [vmem:[#allocation5 + $0x40] sm:$0xff]
    %v102 = vld [vmem:[#allocation5 + $0x48] sm:$0xff]
    %v103 = vld [vmem:[#allocation5 + $0x50] sm:$0xff]
    %v104 = vld [vmem:[#allocation5 + $0x58] sm:$0xff]
    %v105 = vld [vmem:[#allocation5 + $0x60] sm:$0xff]
    %v106 = vld [vmem:[#allocation5 + $0x68] sm:$0xff]
    %v107 = vld [vmem:[#allocation5 + $0x70] sm:$0xff]
    %v108 = vld [vmem:[#allocation5 + $0x78] sm:$0xff]
    %v109 = vld [vmem:[#allocation7] sm:$0xff]
    %110 = vmatprep.subr.mxu0 0.0
    %111 = vmatpush1.msra.mxu0 %v108
    %112 = vmatprep.subr.mxu0 0.0
    %113 = vmatpush1.msra.mxu0 %v107
    %114 = vmatprep.subr.mxu0 0.0
    %115 = vmatpush1.msra.mxu0 %v106
    %116 = vmatprep.subr.mxu0 0.0
    %117 = vmatpush1.msra.mxu0 %v105
    %118 = vmatprep.subr.mxu0 0.0
    %119 = vmatpush1.msra.mxu0 %v104
    %120 = vmatprep.subr.mxu0 0.0
    %121 = vmatpush1.msra.mxu0 %v103
    %122 = vmatprep.subr.mxu0 0.0
    %123 = vmatpush1.msra.mxu0 %v102
    %124 = vmatprep.subr.mxu0 0.0
    %125 = vmatpush1.msra.mxu0 %v101
    %126 = vmatprep.subr.mxu0 0.0
    %127 = vmatpush1.msra.mxu0 %v100
    %128 = vmatprep.subr.mxu0 0.0
    %129 = vmatpush1.msra.mxu0 %v99
    %130 = vmatprep.subr.mxu0 0.0
    %131 = vmatpush1.msra.mxu0 %v98
    %132 = vmatprep.subr.mxu0 0.0
    %133 = vmatpush1.msra.mxu0 %v97
    %134 = vmatprep.subr.mxu0 0.0
    %135 = vmatpush1.msra.mxu0 %v96
    %136 = vmatprep.subr.mxu0 0.0
    %137 = vmatpush1.msra.mxu0 %v95
    %138 = vmatprep.subr.mxu0 0.0
    %139 = vmatpush1.msra.mxu0 %v94
    %140 = vmatprep.subr.mxu0 0.0
    %141 = vmatpush1.msra.mxu0 %v93
    %142 = vmatprep.subr.mxu0 0.0
    %143 = vmatpush2.msra.mxu0 0.0
    %144 = vmatprep.subr.mxu0 0.0
    %145 = vmatpush2.msra.mxu0 0.0
    %146 = vmatprep.subr.mxu0 0.0
    %147 = vmatpush2.msra.mxu0 0.0
    %148 = vmatprep.subr.mxu0 0.0
    %149 = vmatpush2.msra.mxu0 0.0
    %150 = vmatprep.subr.mxu0 0.0
    %151 = vmatpush2.msra.mxu0 0.0
    %152 = vmatprep.subr.mxu0 0.0
    %153 = vmatpush2.msra.mxu0 0.0
    %154 = vmatprep.subr.mxu0 0.0
    %155 = vmatpush2.msra.mxu0 0.0
    %156 = vmatprep.subr.mxu0 0.0
    %157 = vmatpush2.msra.mxu0 0.0
    %158 = vmatprep.subr.mxu0 0.0
    %159 = vmatpush2.msra.mxu0 0.0
    %160 = vmatprep.subr.mxu0 0.0
    %161 = vmatpush2.msra.mxu0 0.0
    %162 = vmatprep.subr.mxu0 0.0
    %163 = vmatpush2.msra.mxu0 0.0
    %164 = vmatprep.subr.mxu0 0.0
    %165 = vmatpush2.msra.mxu0 0.0
    %166 = vmatprep.subr.mxu0 0.0
    %167 = vmatpush2.msra.mxu0 0.0
    %168 = vmatprep.subr.mxu0 0.0
    %169 = vmatpush2.msra.mxu0 0.0
    %170 = vmatprep.subr.mxu0 0.0
    %171 = vmatpush2.msra.mxu0 0.0
    %172 = vmatprep.subr.mxu0 0.0
    %173 = vmatpush2.msra.mxu0 0.0
    %174 = vmatprep.mubr.f32.mxu0 0.0
    %175 = vmatmul.mubr.f32.gmra.mxu0 %v92
    %v176 = vpop.f32.mrf.mxu0
    %v177 = vadd.f32 %v109, %v176
    %v178 = vpop.f32.mrf.mxu0
    %179 = vdwg.mxu0
    %v180 = vmax.f32 %v177, 0.0
    %s181 = scalar_lea.vmem [#allocation5], 128
    %v182 = vld [vmem:[%s181] sm:$0xff]
    %v183 = vld [vmem:[%s181 + $0x8] sm:$0xff]
    %v184 = vld [vmem:[%s181 + $0x10] sm:$0xff]
    %v185 = vld [vmem:[%s181 + $0x18] sm:$0xff]
    %v186 = vld [vmem:[%s181 + $0x20] sm:$0xff]
    %v187 = vld [vmem:[%s181 + $0x28] sm:$0xff]
    %v188 = vld [vmem:[%s181 + $0x30] sm:$0xff]
    %v189 = vld [vmem:[%s181 + $0x38] sm:$0xff]
    %v190 = vld [vmem:[%s181 + $0x40] sm:$0xff]
    %v191 = vld [vmem:[%s181 + $0x48] sm:$0xff]
    %v192 = vld [vmem:[%s181 + $0x50] sm:$0xff]
    %v193 = vld [vmem:[%s181 + $0x58] sm:$0xff]
    %v194 = vld [vmem:[%s181 + $0x60] sm:$0xff]
    %v195 = vld [vmem:[%s181 + $0x68] sm:$0xff]
    %v196 = vld [vmem:[%s181 + $0x70] sm:$0xff]
    %v197 = vld [vmem:[%s181 + $0x78] sm:$0xff]
    %s198 = scalar_lea.vmem [#allocation7], 8
    %v199 = vld [vmem:[%s198] sm:$0xff]
    %200 = vmatprep.subr.mxu0 0.0
    %201 = vmatpush1.msra.mxu0 %v197
    %202 = vmatprep.subr.mxu0 0.0
    %203 = vmatpush1.msra.mxu0 %v196
    %204 = vmatprep.subr.mxu0 0.0
    %205 = vmatpush1.msra.mxu0 %v195
    %206 = vmatprep.subr.mxu0 0.0
    %207 = vmatpush1.msra.mxu0 %v194
    %208 = vmatprep.subr.mxu0 0.0
    %209 = vmatpush1.msra.mxu0 %v193
    %210 = vmatprep.subr.mxu0 0.0
    %211 = vmatpush1.msra.mxu0 %v192
    %212 = vmatprep.subr.mxu0 0.0
    %213 = vmatpush1.msra.mxu0 %v191
    %214 = vmatprep.subr.mxu0 0.0
    %215 = vmatpush1.msra.mxu0 %v190
    %216 = vmatprep.subr.mxu0 0.0
    %217 = vmatpush1.msra.mxu0 %v189
    %218 = vmatprep.subr.mxu0 0.0
    %219 = vmatpush1.msra.mxu0 %v188
    %220 = vmatprep.subr.mxu0 0.0
    %221 = vmatpush1.msra.mxu0 %v187
    %222 = vmatprep.subr.mxu0 0.0
    %223 = vmatpush1.msra.mxu0 %v186
    %224 = vmatprep.subr.mxu0 0.0
    %225 = vmatpush1.msra.mxu0 %v185
    %226 = vmatprep.subr.mxu0 0.0
    %227 = vmatpush1.msra.mxu0 %v184
    %228 = vmatprep.subr.mxu0 0.0
    %229 = vmatpush1.msra.mxu0 %v183
    %230 = vmatprep.subr.mxu0 0.0
    %231 = vmatpush1.msra.mxu0 %v182
    %232 = vmatprep.subr.mxu0 0.0
    %233 = vmatpush2.msra.mxu0 0.0
    %234 = vmatprep.subr.mxu0 0.0
    %235 = vmatpush2.msra.mxu0 0.0
    %236 = vmatprep.subr.mxu0 0.0
    %237 = vmatpush2.msra.mxu0 0.0
    %238 = vmatprep.subr.mxu0 0.0
    %239 = vmatpush2.msra.mxu0 0.0
    %240 = vmatprep.subr.mxu0 0.0
    %241 = vmatpush2.msra.mxu0 0.0
    %242 = vmatprep.subr.mxu0 0.0
    %243 = vmatpush2.msra.mxu0 0.0
    %244 = vmatprep.subr.mxu0 0.0
    %245 = vmatpush2.msra.mxu0 0.0
    %246 = vmatprep.subr.mxu0 0.0
    %247 = vmatpush2.msra.mxu0 0.0
    %248 = vmatprep.subr.mxu0 0.0
    %249 = vmatpush2.msra.mxu0 0.0
    %250 = vmatprep.subr.mxu0 0.0
    %251 = vmatpush2.msra.mxu0 0.0
    %252 = vmatprep.subr.mxu0 0.0
    %253 = vmatpush2.msra.mxu0 0.0
    %254 = vmatprep.subr.mxu0 0.0
    %255 = vmatpush2.msra.mxu0 0.0
    %256 = vmatprep.subr.mxu0 0.0
    %257 = vmatpush2.msra.mxu0 0.0
    %258 = vmatprep.subr.mxu0 0.0
    %259 = vmatpush2.msra.mxu0 0.0
    %260 = vmatprep.subr.mxu0 0.0
    %261 = vmatpush2.msra.mxu0 0.0
    %262 = vmatprep.subr.mxu0 0.0
    %263 = vmatpush2.msra.mxu0 0.0
    %264 = vmatprep.mubr.f32.mxu0 0.0
    %265 = vmatmul.mubr.f32.gmra.mxu0 %v180
    %v266 = vpop.f32.mrf.mxu0
    %v267 = vadd.f32 %v199, %v266
    %v268 = vpop.f32.mrf.mxu0
    %269 = vdwg.mxu0
    %v270 = vmax.f32 %v267, 0.0
    %v271 = vld [vmem:[#allocation8] sm:$0xff]
    %v272 = vld [vmem:[#allocation8 + $0x8] sm:$0xff]
    %v273 = vld [vmem:[#allocation8 + $0x10] sm:$0xff]
    %v274 = vld [vmem:[#allocation8 + $0x18] sm:$0xff]
    %v275 = vld [vmem:[#allocation8 + $0x20] sm:$0xff]
    %v276 = vld [vmem:[#allocation8 + $0x28] sm:$0xff]
    %v277 = vld [vmem:[#allocation8 + $0x30] sm:$0xff]
    %v278 = vld [vmem:[#allocation8 + $0x38] sm:$0xff]
    %v279 = vld [vmem:[#allocation8 + $0x40] sm:$0xff]
    %v280 = vld [vmem:[#allocation8 + $0x48] sm:$0xff]
    %v281 = vld [vmem:[#allocation8 + $0x50] sm:$0xff]
    %v282 = vld [vmem:[#allocation8 + $0x58] sm:$0xff]
    %v283 = vld [vmem:[#allocation8 + $0x60] sm:$0xff]
    %v284 = vld [vmem:[#allocation8 + $0x68] sm:$0xff]
    %v285 = vld [vmem:[#allocation8 + $0x70] sm:$0xff]
    %v286 = vld [vmem:[#allocation8 + $0x78] sm:$0xff]
    %v287 = vld [vmem:[#allocation8 + $0x80] sm:$0xff]
    %v288 = vld [vmem:[#allocation8 + $0x88] sm:$0xff]
    %v289 = vld [vmem:[#allocation8 + $0x90] sm:$0xff]
    %v290 = vld [vmem:[#allocation8 + $0x98] sm:$0xff]
    %v291 = vld [vmem:[#allocation8 + $0xa0] sm:$0xff]
    %v292 = vld [vmem:[#allocation8 + $0xa8] sm:$0xff]
    %v293 = vld [vmem:[#allocation8 + $0xb0] sm:$0xff]
    %v294 = vld [vmem:[#allocation8 + $0xb8] sm:$0xff]
    %v295 = vld [vmem:[#allocation8 + $0xc0] sm:$0xff]
    %v296 = vld [vmem:[#allocation8 + $0xc8] sm:$0xff]
    %v297 = vld [vmem:[#allocation8 + $0xd0] sm:$0xff]
    %v298 = vld [vmem:[#allocation8 + $0xd8] sm:$0xff]
    %v299 = vld [vmem:[#allocation8 + $0xe0] sm:$0xff]
    %v300 = vld [vmem:[#allocation8 + $0xe8] sm:$0xff]
    %v301 = vld [vmem:[#allocation8 + $0xf0] sm:$0xff]
    %v302 = vld [vmem:[#allocation8 + $0xf8] sm:$0xff]
    %v303 = vld [vmem:[#allocation10] sm:$0x3]
    %v305 = vlaneseq
    %v306 = vshrl.u32 %v305, 7
    %v307 = vsub.s32 0, %v306
    %v308 = vrot.slane %v303, %v307
    %v309 = vlaneseq
    %v310 = vshrl.u32 %v309, 7
    %v311 = vsub.s32 1, %v310
    %v312 = vrot.slane %v303, %v311
    %315 = vmatprep.subr.mxu0 %v302
    %316 = vmatpush1.msra.mxu0 %v301
    %317 = vmatprep.subr.mxu0 %v300
    %318 = vmatpush1.msra.mxu0 %v299
    %319 = vmatprep.subr.mxu0 %v298
    %320 = vmatpush1.msra.mxu0 %v297
    %321 = vmatprep.subr.mxu0 %v296
    %322 = vmatpush1.msra.mxu0 %v295
    %323 = vmatprep.subr.mxu0 %v294
    %324 = vmatpush1.msra.mxu0 %v293
    %325 = vmatprep.subr.mxu0 %v292
    %326 = vmatpush1.msra.mxu0 %v291
    %327 = vmatprep.subr.mxu0 %v290
    %328 = vmatpush1.msra.mxu0 %v289
    %329 = vmatprep.subr.mxu0 %v288
    %330 = vmatpush1.msra.mxu0 %v287
    %331 = vmatprep.subr.mxu0 %v286
    %332 = vmatpush1.msra.mxu0 %v285
    %333 = vmatprep.subr.mxu0 %v284
    %334 = vmatpush1.msra.mxu0 %v283
    %335 = vmatprep.subr.mxu0 %v282
    %336 = vmatpush1.msra.mxu0 %v281
    %337 = vmatprep.subr.mxu0 %v280
    %338 = vmatpush1.msra.mxu0 %v279
    %339 = vmatprep.subr.mxu0 %v278
    %340 = vmatpush1.msra.mxu0 %v277
    %341 = vmatprep.subr.mxu0 %v276
    %342 = vmatpush1.msra.mxu0 %v275
    %343 = vmatprep.subr.mxu0 %v274
    %344 = vmatpush1.msra.mxu0 %v273
    %345 = vmatprep.subr.mxu0 %v272
    %346 = vmatpush1.msra.mxu0 %v271
    %347 = vmatprep.subr.mxu0 0.0
    %348 = vmatpush2.msra.mxu0 0.0
    %349 = vmatprep.subr.mxu0 0.0
    %350 = vmatpush2.msra.mxu0 0.0
    %351 = vmatprep.subr.mxu0 0.0
    %352 = vmatpush2.msra.mxu0 0.0
    %353 = vmatprep.subr.mxu0 0.0
    %354 = vmatpush2.msra.mxu0 0.0
    %355 = vmatprep.subr.mxu0 0.0
    %356 = vmatpush2.msra.mxu0 0.0
    %357 = vmatprep.subr.mxu0 0.0
    %358 = vmatpush2.msra.mxu0 0.0
    %359 = vmatprep.subr.mxu0 0.0
    %360 = vmatpush2.msra.mxu0 0.0
    %361 = vmatprep.subr.mxu0 0.0
    %362 = vmatpush2.msra.mxu0 0.0
    %363 = vmatprep.subr.mxu0 0.0
    %364 = vmatpush2.msra.mxu0 0.0
    %365 = vmatprep.subr.mxu0 0.0
    %366 = vmatpush2.msra.mxu0 0.0
    %367 = vmatprep.subr.mxu0 0.0
    %368 = vmatpush2.msra.mxu0 0.0
    %369 = vmatprep.subr.mxu0 0.0
    %370 = vmatpush2.msra.mxu0 0.0
    %371 = vmatprep.subr.mxu0 0.0
    %372 = vmatpush2.msra.mxu0 0.0
    %373 = vmatprep.subr.mxu0 0.0
    %374 = vmatpush2.msra.mxu0 0.0
    %375 = vmatprep.subr.mxu0 0.0
    %376 = vmatpush2.msra.mxu0 0.0
    %377 = vmatprep.subr.mxu0 0.0
    %378 = vmatpush2.msra.mxu0 0.0
    %379 = vmatprep.mubr.f32.mxu0 0.0
    %380 = vmatmul.mubr.f32.gmra.mxu0 %v270
    %v381 = vpop.f32.mrf.mxu0
    %v382 = vadd.f32 %v308, %v381
    %v383 = vpop.f32.mrf.mxu0
    %v384 = vadd.f32 %v312, %v383
    %385 = vdwg.mxu0
    %v386 = vmul.f32 %v384, 1.442695
    %v387 = vpow.pop %v386
    %388 = vst [vmem:[#allocation11] sm:$0xff] %v382
    %389 = vst [vmem:[#allocation12] sm:$0xff] %v387
    %v390 = vrsqrt.pop %v387
    %v391 = vmul.f32 %v387, %v390
    %vm392 = vcmp.eq.f32.partialorder %v387, inf
    %v393 = vsel %vm392, %v387, %v391
    %vm394 = vcmp.eq.f32.partialorder %v387, 0.0
    %v395 = vand.u32 %v387, 2147483648
    %v396 = vsel %vm394, %v395, %v393
    %v397 = vld [vmem:[%s5] sm:$0xff]
    %v398 = vmul.f32 %v396, %v397
    %v399 = vadd.f32 %v382, %v398
    %400 = vst [vmem:[#allocation14] sm:$0xff] %v399
    // Predicated region
    $region46: #{tpu_custom_call.1} parent=1 // pred_check
      _
    $region47: #{tpu_custom_call.1} parent=1 // pred_check_branch
      %402 = sbr.rel (0) target = $region49
    $region48: #{tpu_custom_call.1} parent=1 // pred_region
      %s404 = ssub.s32 128, 128
      %405 = vsyncadd [#allocation4], %s404
      %s407 = sshll.u32 [#allocation11], 4
      %s408 = int_to_ptr.vmem [resolvable:$true] %s407
      %410 = dma.vmem_to_hbm [thread:$0]  %s408, 128, %s6, [#allocation4]
    $region49: #{tpu_custom_call.1} parent=1 // pred_fallthru
      _
    // Predicated region
    $region50: #{tpu_custom_call.1} parent=1 // pred_check
      _
    $region51: #{tpu_custom_call.1} parent=1 // pred_check_branch
      %412 = sbr.rel (0) target = $region53
    $region52: #{tpu_custom_call.1} parent=1 // pred_region
      %s414 = ssub.s32 128, 128
      %415 = vsyncadd [#allocation13], %s414
      %s417 = sshll.u32 [#allocation12], 4
      %s418 = int_to_ptr.vmem [resolvable:$true] %s417
      %420 = dma.vmem_to_hbm [thread:$0]  %s418, 128, %s7, [#allocation13]
    $region53: #{tpu_custom_call.1} parent=1 // pred_fallthru
      _
    // Predicated region
    $region54: #{tpu_custom_call.1} parent=1 // pred_check
      _
    $region55: #{tpu_custom_call.1} parent=1 // pred_check_branch
      %422 = sbr.rel (0) target = $region57
    $region56: #{tpu_custom_call.1} parent=1 // pred_region
      %s424 = ssub.s32 128, 128
      %425 = vsyncadd [#allocation13], %s424
      %s427 = sshll.u32 [#allocation14], 4
      %s428 = int_to_ptr.vmem [resolvable:$true] %s427
      %430 = dma.vmem_to_hbm [thread:$0]  %s428, 128, %s8, [#allocation13]
    $region57: #{tpu_custom_call.1} parent=1 // pred_fallthru
      _
    // Predicated region
    $region58: #{tpu_custom_call.1} parent=1 // pred_check
      _
    $region59: #{tpu_custom_call.1} parent=1 // pred_check_branch
      %432 = sbr.rel (0) target = $region61
    $region60: #{tpu_custom_call.1} parent=1 // pred_region
      %433 = dma.done [#allocation4], 128
    $region61: #{tpu_custom_call.1} parent=1 // pred_fallthru
      _
    // Predicated region
    $region62: #{tpu_custom_call.1} parent=1 // pred_check
      _
    $region63: #{tpu_custom_call.1} parent=1 // pred_check_branch
      %435 = sbr.rel (0) target = $region65
    $region64: #{tpu_custom_call.1} parent=1 // pred_region
      %436 = dma.done [#allocation13], 128
    $region65: #{tpu_custom_call.1} parent=1 // pred_fallthru
      _
    // Predicated region
    $region66: #{tpu_custom_call.1} parent=1 // pred_check
      _
    $region67: #{tpu_custom_call.1} parent=1 // pred_check_branch
      %438 = sbr.rel (0) target = $region69
    $region68: #{tpu_custom_call.1} parent=1 // pred_region
      %439 = dma.done [#allocation13], 128
    $region69: #{tpu_custom_call.1} parent=1 // pred_fallthru
      _
    %440 = vsyncpa [#allocation3], 1
    %441 = vsyncpa [#allocation6], 1
    %442 = vsyncpa [#allocation9], 1
    %443 = vsyncpa [#allocation4], 1
    %444 = vsyncpa [#allocation13], 1

</llo_original>
